<compile_context>
chip_gen: v7x
topology: tpu7x:2x2x1
jax: 0.10.0
libtpu: 0.0.40
codegen_flags: <defaults>
</compile_context>

<pallas_src>
import functools
import math

import jax
import jax.numpy as jnp
from jax.experimental import pallas as pl
from jax.experimental.pallas import tpu as pltpu


def _round_up(x, m):
    return ((x + m - 1) // m) * m


# ---------------------------------------------------------------------------
# Kernel A: fused feature transform  XW = [relu?](x) @ [W_low | W_high | W_mlp]
# Emits two views of XW:
#   xw_lh (bf16): [xw_low | xw_high]  -> streamed operand of the propagation matmul
#   xw_hm (f32) : [xw_high | xw_mlp]  -> per-row epilogue operand
# ---------------------------------------------------------------------------
def _xw_kernel(x_ref, w_ref, lh_ref, hm_ref, *, fp, relu_input):
    x = x_ref[...].astype(jnp.float32)
    if relu_input:
        x = jnp.maximum(x, 0.0)                      # inter-layer F.relu(fea1)
    xw = jnp.dot(x, w_ref[...], preferred_element_type=jnp.float32)   # (tm, 3*fp)
    lh_ref[...] = xw[:, : 2 * fp].astype(lh_ref.dtype)
    hm_ref[...] = xw[:, fp: 3 * fp].astype(hm_ref.dtype)


# ---------------------------------------------------------------------------
# Kernel B: tiled propagation + ACM attention (one GraphConvolution layer)
# grid = (row tiles [parallel], K tiles [arbitrary reduction])
# ---------------------------------------------------------------------------
def _prop_attn_kernel(adj_ref, xwlh_ref, xwhm_ref, avl_ref, avh_ref, avm_ref,
                      attvec_ref, out_ref, acc_ref, *, tk, fp, f_out,
                      log_softmax_output):
    k = pl.program_id(1)

    @pl.when(k == 0)
    def _init():
        acc_ref[...] = jnp.zeros_like(acc_ref)

    # One pass over the adj_low row tile propagates BOTH branches at once:
    #   acc += adj_low[i, k] @ [xw_low | xw_high][k]
    k_start = pl.multiple_of(k * tk, tk)
    xw_k = xwlh_ref[pl.ds(k_start, tk), :]                     # (tk, 2*fp) bf16
    acc_ref[...] += jnp.dot(adj_ref[...], xw_k,
                            preferred_element_type=jnp.float32)

    @pl.when(k == pl.num_programs(1) - 1)
    def _finalize():
        acc = acc_ref[...]                                     # (tm, 2*fp) f32
        xw_hm = xwhm_ref[...]                                  # (tm, 2*fp) f32
        out_low = jnp.maximum(acc[:, :fp], 0.0)
        # adj_high = I - adj_low  =>  out_high = relu(xw_high - adj_low @ xw_high)
        out_high = jnp.maximum(xw_hm[:, :fp] - acc[:, fp:], 0.0)
        out_mlp = jnp.maximum(xw_hm[:, fp:], 0.0)

        # attention3 (acm_model == 'acmgcn' -> no layernorm)
        s_low = jax.nn.sigmoid(jnp.dot(out_low, avl_ref[...],
                                       preferred_element_type=jnp.float32))
        s_high = jax.nn.sigmoid(jnp.dot(out_high, avh_ref[...],
                                        preferred_element_type=jnp.float32))
        s_mlp = jax.nn.sigmoid(jnp.dot(out_mlp, avm_ref[...],
                                       preferred_element_type=jnp.float32))

        # logits = sigmoid([l_low l_high l_mlp]) @ att_vec / 3, expanded so the
        # 3-way softmax is explicit VPU math on (tm,1) columns (no lane reduce).
        inv_t = 1.0 / 3.0
        lg = []
        for j in range(3):
            lg.append((s_low * attvec_ref[0, j]
                       + s_high * attvec_ref[1, j]
                       + s_mlp * attvec_ref[2, j]) * inv_t)
        m = jnp.maximum(jnp.maximum(lg[0], lg[1]), lg[2])
        e0 = jnp.exp(lg[0] - m)
        e1 = jnp.exp(lg[1] - m)
        e2 = jnp.exp(lg[2] - m)
        inv_den = pl.reciprocal(e0 + e1 + e2, approx=True)

        y = 3.0 * ((e0 * inv_den) * out_low
                   + (e1 * inv_den) * out_high
                   + (e2 * inv_den) * out_mlp)                 # (tm, fp)

        if log_softmax_output:
            # final-layer F.log_softmax over the f_out valid class lanes only
            lane = jax.lax.broadcasted_iota(jnp.int32, y.shape, 1)
            valid = lane < f_out
            ym = jnp.where(valid, y, -jnp.inf)
            mx = jnp.max(ym, axis=1, keepdims=True)
            ex = jnp.where(valid, jnp.exp(ym - mx), 0.0)
            lse = jnp.log(jnp.sum(ex, axis=1, keepdims=True))
            y = jnp.where(valid, ym - mx - lse, 0.0)

        out_ref[...] = y.astype(out_ref.dtype)


# ---------------------------------------------------------------------------
# Wrapper: one GraphConvolution layer
# ---------------------------------------------------------------------------
def acm_graph_conv(x, adj_low_bf16, params, *, relu_input=False,
                   log_softmax_output=False, tm=256, tk=256, tm_transform=256,
                   vmem_limit_bytes=None):
    """Returns a 128-lane-padded (N, fp) f32 slab; valid columns are [:f_out].

    For large graphs raise tm/tk per generation (v6e: up to ~2048, v7x: ~512-1024
    to respect 64 MiB VMEM) and set vmem_limit_bytes accordingly.
    """
    n = adj_low_bf16.shape[0]
    fp = params["fp"]
    f_out = params["f_out"]
    f_in = x.shape[1]
    tm = min(tm, n)
    tk = min(tk, n)
    tm_transform = min(tm_transform, n)
    assert n % tm == 0 and n % tk == 0 and n % tm_transform == 0, \
        "pad the graph so N is a multiple of the tile sizes"
    # TODO(synk): ragged N (non-multiple of tile) would need row/col padding of adj.

    # ---- kernel A: fused feature transform --------------------------------
    xw_lh, xw_hm = pl.pallas_call(
        functools.partial(_xw_kernel, fp=fp, relu_input=relu_input),
        out_shape=(jax.ShapeDtypeStruct((n, 2 * fp), jnp.bfloat16),
                   jax.ShapeDtypeStruct((n, 2 * fp), jnp.float32)),
        grid=(n // tm_transform,),
        in_specs=[pl.BlockSpec((tm_transform, f_in), lambda i: (i, 0)),
                  pl.BlockSpec((f_in, 3 * fp), lambda i: (0, 0))],
        out_specs=(pl.BlockSpec((tm_transform, 2 * fp), lambda i: (i, 0)),
                   pl.BlockSpec((tm_transform, 2 * fp), lambda i: (i, 0))),
        compiler_params=pltpu.CompilerParams(
            dimension_semantics=("parallel",),
            vmem_limit_bytes=vmem_limit_bytes),
    )(x, params["w_cat"])

    # ---- kernel B: tiled propagation + attention ---------------------------
    flops = 2 * n * n * (2 * fp) + 3 * 2 * n * fp
    bytes_accessed = (n * n * 2          # adj_low bf16 stream (dominant term)
                      + n * 2 * fp * 2   # xw_lh bf16 (VMEM-resident, fetched once)
                      + n * 2 * fp * 4   # xw_hm f32
                      + n * fp * 4)      # padded output slab
    cost = pl.CostEstimate(flops=int(flops), transcendentals=int(6 * n),
                           bytes_accessed=int(bytes_accessed))

    out = pl.pallas_call(
        functools.partial(_prop_attn_kernel, tk=tk, fp=fp, f_out=f_out,
                          log_softmax_output=log_softmax_output),
        out_shape=jax.ShapeDtypeStruct((n, fp), jnp.float32),
        grid=(n // tm, n // tk),
        in_specs=[
            pl.BlockSpec((tm, tk), lambda i, k: (i, k)),        # adj_low tiles (bf16)
            pl.BlockSpec((n, 2 * fp), lambda i, k: (0, 0)),     # XW_lh, whole-VMEM resident
            pl.BlockSpec((tm, 2 * fp), lambda i, k: (i, 0)),    # XW_hm rows of tile i
            pl.BlockSpec((fp, 1), lambda i, k: (0, 0)),         # att_vec_low
            pl.BlockSpec((fp, 1), lambda i, k: (0, 0)),         # att_vec_high
            pl.BlockSpec((fp, 1), lambda i, k: (0, 0)),         # att_vec_mlp
            pl.BlockSpec(memory_space=pltpu.MemorySpace.SMEM),  # att_vec (3,3) scalars
        ],
        out_specs=pl.BlockSpec((tm, fp), lambda i, k: (i, 0)),
        scratch_shapes=[pltpu.VMEM((tm, 2 * fp), jnp.float32)],
        compiler_params=pltpu.CompilerParams(
            dimension_semantics=("parallel", "arbitrary"),
            vmem_limit_bytes=vmem_limit_bytes),
        cost_estimate=cost,
    )(adj_low_bf16, xw_lh, xw_hm,
      params["av_low"], params["av_high"], params["av_mlp"], params["att_vec"])
    return out


# ---------------------------------------------------------------------------
# Parameters (mirrors GraphConvolution.reset_parameters) + MXU-friendly packing
# ---------------------------------------------------------------------------
def init_gc_params(key, f_in, f_out):
    ks = jax.random.split(key, 7)
    stdv = 1.0 / math.sqrt(f_out)          # 1/sqrt(weight_mlp.size(1))
    std_att = 1.0                          # 1/sqrt(att_vec_mlp.size(1) == 1)
    std_att_vec = 1.0 / math.sqrt(3.0)     # 1/sqrt(att_vec.size(1) == 3)
    u = lambda k, shape, s: jax.random.uniform(k, shape, jnp.float32, -s, s)
    return dict(
        w_low=u(ks[0], (f_in, f_out), stdv),
        w_high=u(ks[1], (f_in, f_out), stdv),
        w_mlp=u(ks[2], (f_in, f_out), stdv),
        av_low=u(ks[3], (f_out, 1), std_att),
        av_high=u(ks[4], (f_out, 1), std_att),
        av_mlp=u(ks[5], (f_out, 1), std_att),
        att_vec=u(ks[6], (3, 3), std_att_vec),
    )


def pack_gc_params(raw, f_in_kernel, fp):
    """Pack per-branch weights into lane-padded, concatenated operands."""
    f_in, f_out = raw["w_low"].shape
    assert f_in_kernel >= f_in and fp >= f_out
    w_cat = jnp.zeros((f_in_kernel, 3 * fp), jnp.float32)
    w_cat = w_cat.at[:f_in, 0 * fp:0 * fp + f_out].set(raw["w_low"])
    w_cat = w_cat.at[:f_in, 1 * fp:1 * fp + f_out].set(raw["w_high"])
    w_cat = w_cat.at[:f_in, 2 * fp:2 * fp + f_out].set(raw["w_mlp"])
    pad_av = lambda a: jnp.zeros((fp, 1), jnp.float32).at[:f_out, :].set(a)
    return dict(w_cat=w_cat,
                av_low=pad_av(raw["av_low"]),
                av_high=pad_av(raw["av_high"]),
                av_mlp=pad_av(raw["av_mlp"]),
                att_vec=raw["att_vec"],
                fp=fp, f_out=f_out)


def acmgcn_forward(x, adj_low, params_l0, params_l1, *, nclass, **tile_kw):
    """ACMGCN forward (acm_model='acmgcn', inference).  adj_high = I - adj_low is
    derived inside the kernel and never materialized / streamed."""
    adj_bf16 = adj_low.astype(jnp.bfloat16)     # halves HBM bytes of the dominant operand
    # x = dropout(x) -> identity at inference
    fea1 = acm_graph_conv(x, adj_bf16, params_l0, **tile_kw)             # (N, fp) padded
    # fea1 = dropout(relu(fea1)) -> relu fused into the layer-2 transform kernel
    fea2 = acm_graph_conv(fea1, adj_bf16, params_l1, relu_input=True,
                          log_softmax_output=True, **tile_kw)            # (N, fp) padded
    # TODO(synk): on v5e/v6e (128 MiB VMEM) both layers could be fused into one
    # pallas_call keeping adj_low resident across layers (halves adj HBM traffic).
    return fea2[:, :nclass]                     # = F.log_softmax(fea2, dim=1)


if __name__ == "__main__":
    N_NODES, F_IN, NHID, NCLASS = 512, 64, 64, 16
    FP = _round_up(max(NHID, NCLASS), 128)      # 128-lane slot per branch

    key = jax.random.PRNGKey(0)
    k_adj, k_x, k_p0, k_p1 = jax.random.split(key, 4)

    # synthetic symmetric adjacency, then the ACMGCN.fit preprocessing:
    # adj_low = row_normalize(I + A);  adj_high = I - adj_low (derived in-kernel)
    a = (jax.random.uniform(k_adj, (N_NODES, N_NODES)) < 0.02).astype(jnp.float32)
    a = jnp.maximum(a, a.T) * (1.0 - jnp.eye(N_NODES, dtype=jnp.float32))
    adj = jnp.eye(N_NODES, dtype=jnp.float32) + a
    rowsum = jnp.sum(adj, axis=1)
    r_inv = jnp.where(rowsum > 0, 1.0 / rowsum, 0.0)     # normalize_tensor
    adj_low = r_inv[:, None] * adj

    # row-normalized node features (normalize_tensor(self.X) in fit)
    x_raw = jax.random.uniform(k_x, (N_NODES, F_IN), jnp.float32)
    xs = jnp.sum(x_raw, axis=1)
    x = jnp.where(xs > 0, 1.0 / xs, 0.0)[:, None] * x_raw

    raw0 = init_gc_params(k_p0, F_IN, NHID)      # gcns[0]: in_features -> nhid
    raw1 = init_gc_params(k_p1, NHID, NCLASS)    # gcns[1]: nhid -> class_num
    params_l0 = pack_gc_params(raw0, F_IN, FP)
    params_l1 = pack_gc_params(raw1, FP, FP)     # consumes the padded fea1 slab

    out = acmgcn_forward(x, adj_low, params_l0, params_l1, nclass=NCLASS,
                         tm=256, tk=256, tm_transform=256)
    out = jax.block_until_ready(out)

    assert out.shape == (N_NODES, NCLASS)
    assert bool(jnp.all(jnp.isfinite(out)))
    # rows of log_softmax should exp-sum to 1
    assert bool(jnp.allclose(jnp.sum(jnp.exp(out), axis=1), 1.0, atol=1e-4))

    # TODO(synk): training-time dropout and the fit/test loop are not part of the
    # inference hot path and are omitted.
    print("KERNEL_OK")
</pallas_src>

<mosaic_0001>
module attributes {stable_mosaic.version = 11 : i64} {
  func.func @_xw_kernel(%arg0: i32, %arg1: memref<256x64xf32, #tpu.memory_space<vmem>>, %arg2: memref<64x384xf32, #tpu.memory_space<vmem>>, %arg3: memref<256x256xbf16, #tpu.memory_space<vmem>>, %arg4: memref<256x256xf32, #tpu.memory_space<vmem>>) attributes {dimension_semantics = [#tpu.dimension_semantics<parallel>], iteration_bounds = array<i64: 2>, scalar_prefetch = 0 : i64, scratch_operands = 0 : i64, tpu.core_type = #tpu.core_type<tc>, window_params = [{transform_indices = @transform_0, window_bounds = array<i64: 256, 64>}, {pipeline_mode = #tpu.pipeline_mode<synchronous>, transform_indices = @transform_1, window_bounds = array<i64: 64, 384>}, {transform_indices = @transform_2, window_bounds = array<i64: 256, 256>}, {transform_indices = @transform_3, window_bounds = array<i64: 256, 256>}]} {
    %c0 = arith.constant 0 : index
    %c0_0 = arith.constant 0 : index
    %0 = vector.load %arg1[%c0, %c0_0] : memref<256x64xf32, #tpu.memory_space<vmem>>, vector<256x64xf32>
    %c0_1 = arith.constant 0 : index
    %c0_2 = arith.constant 0 : index
    %1 = vector.load %arg2[%c0_1, %c0_2] : memref<64x384xf32, #tpu.memory_space<vmem>>, vector<64x384xf32>
    %cst = arith.constant dense<0.000000e+00> : vector<256x384xf32>
    %2 = tpu.matmul %0, %1, %cst {dimension_numbers = #tpu.dot_dimension_numbers<[1], [0], [0], [1], [0, 0, 1, 1], [], []>} : vector<256x64xf32>, vector<64x384xf32>, vector<256x384xf32> -> vector<256x384xf32>
    %3 = vector.extract_strided_slice %2 {offsets = [0, 0], sizes = [256, 256], strides = [1, 1]} : vector<256x384xf32> to vector<256x256xf32>
    %4 = arith.truncf %3 : vector<256x256xf32> to vector<256x256xbf16>
    %c0_3 = arith.constant 0 : index
    %c0_4 = arith.constant 0 : index
    %5 = vector.load %arg3[%c0_3, %c0_4] : memref<256x256xbf16, #tpu.memory_space<vmem>>, vector<256x256xbf16>
    tpu.vector_store %arg3[%c0_3, %c0_4], %4 {strides = array<i32>} : memref<256x256xbf16, #tpu.memory_space<vmem>>, vector<256x256xbf16>,
    %6 = vector.extract_strided_slice %2 {offsets = [0, 128], sizes = [256, 256], strides = [1, 1]} : vector<256x384xf32> to vector<256x256xf32>
    %c0_5 = arith.constant 0 : index
    %c0_6 = arith.constant 0 : index
    %7 = vector.load %arg4[%c0_5, %c0_6] : memref<256x256xf32, #tpu.memory_space<vmem>>, vector<256x256xf32>
    tpu.vector_store %arg4[%c0_5, %c0_6], %6 {strides = array<i32>} : memref<256x256xf32, #tpu.memory_space<vmem>>, vector<256x256xf32>,
    return
  }
  func.func @transform_0(%arg0: i32) -> (i32, i32) {
    %c0_i32 = arith.constant 0 : i32
    %c0_i32_0 = arith.constant 0 : i32
    return %arg0, %c0_i32 : i32, i32
  }
  func.func @transform_1(%arg0: i32) -> (i32, i32) {
    %c0_i32 = arith.constant 0 : i32
    %c0_i32_0 = arith.constant 0 : i32
    %c0_i32_1 = arith.constant 0 : i32
    return %c0_i32, %c0_i32_0 : i32, i32
  }
  func.func @transform_2(%arg0: i32) -> (i32, i32) {
    %c0_i32 = arith.constant 0 : i32
    %c0_i32_0 = arith.constant 0 : i32
    return %arg0, %c0_i32 : i32, i32
  }
  func.func @transform_3(%arg0: i32) -> (i32, i32) {
    %c0_i32 = arith.constant 0 : i32
    %c0_i32_0 = arith.constant 0 : i32
    return %arg0, %c0_i32 : i32, i32
  }
}

</mosaic_0001>

<llo_original>
// kernel: tpu_custom_call.1
$region0: #{tpu_custom_call.1}
  #allocation0 [shape = 'u32[]', space=smem, size = 0x4, offset = 0x4, fixed_abs, tag = 'smem constant byte address 0x4 - core index']
  #allocation1 [shape = 'u32[144,128]{1,0:T(1,128)}', space=vmem, size = 0x12000, scoped, tag = 'internal scratch']
  %s0 = inlined_call_operand.vmem [shape: f32[512,64], index: 0, kind: input, shape index: {}]
  %s1 = inlined_call_operand.vmem [shape: f32[64,384], index: 1, kind: input, shape index: {}]
  %s2 = inlined_call_operand.hbm [shape: bf16[512,256], index: 2, kind: output, shape index: {0}]
  %s3 = inlined_call_operand.hbm [shape: f32[512,256], index: 3, kind: output, shape index: {1}]
  %4 = xla_tuple %s2, %s3
  %s5 = sld [smem:[#allocation0]]
  $region49: #{tpu_custom_call.1} parent=0
    _
  %s7 = ssub.s32 1, %s5
  %s8 = scalar_select 0, %s7, %s5
  $region1: #{tpu_custom_call.1} parent=0
    #allocation2 [shape = 'u8[262144]{0}', space=vmem, size = 0x40000, scoped, tag = 'output window, operand 0']
    #allocation3 [shape = 's32[2]{0}', space=sflag, size = 0x8, scoped, tag = 'scoped memory for tpu_custom_call.1']
    #allocation4 [shape = 'u8[524288]{0}', space=vmem, size = 0x80000, scoped, tag = 'output window, operand 1']
    #allocation5 [shape = 's32[2]{0}', space=sflag, size = 0x8, scoped, tag = 'scoped memory for tpu_custom_call.1']
    %9 = vsyncpa [#allocation3], 0
    %s10 = scalar_lea.sflag [#allocation3], 1
    %11 = vsyncpa %s10, 0
    %12 = vsyncpa [#allocation5], 0
    %s13 = scalar_lea.sflag [#allocation5], 1
    %14 = vsyncpa %s13, 0
    loop: start=0, step=1, limit=4
    $region2: #{tpu_custom_call.1} parent=1 // loop_pre_header
      _
    $region3: #{tpu_custom_call.1} parent=1 // loop_header
      %s16 = sphi 0, %s20
      %p17 = scmp.ge.s32.totalorder %s16, 4
      %s26 = sphi 0, %s28
      %s29 = sphi 0, %s26
      %s30 = sphi 0, %s29
      %s46 = sphi 0, %s30
      %s50 = sphi 0, %s50
      %s52 = sphi 0, %s50
      %s53 = sphi 0, %s52
      %s67 = sphi 0, %s53
      %s73 = sphi 0, %s75
      %s76 = sphi 0, %s73
      %s77 = sphi 0, %s76
      %s93 = sphi 0, %s77
      %s99 = sphi 0, %s101
      %s102 = sphi 0, %s99
      %s103 = sphi 0, %s102
      %s119 = sphi 0, %s103
    $region4: #{tpu_custom_call.1} parent=1 // loop_header_branch
      %19 = sbr.rel (%p17) target = $region8
    $region5: #{tpu_custom_call.1} parent=1 // loop_body
      %s21 = ssub.s32 %s16, 1
      %s22 = ssub.s32 %s16, 2
      %s23 = sadd.s32 %s16, 1
      %s24 = ssub.s32 %s16, %s23
      %p25 = scmp.eq.s32.totalorder %s24, 0
      %s27 = sadd.s32 %s26, 1
      %s28 = scalar_select %p25, %s26, %s27
      %p31 = pneg %p25
      %p32 = scmp.eq.s32.totalorder %s16, 1
      %p33 = por %p31, %p32
      %p34 = scmp.ne.s32.totalorder %s26, %s29
      %p35 = scmp.eq.s32.totalorder %s16, 0
      %p36 = por %p34, %p35
      %p37 = scmp.ne.s32.totalorder %s26, %s29
      %p38 = scmp.eq.s32.totalorder %s21, 1
      %p39 = por %p37, %p38
      %p40 = scmp.ne.s32.totalorder %s29, %s30
      %p41 = scmp.eq.s32.totalorder %s21, 0
      %p42 = por %p40, %p41
      %p43 = scmp.ne.s32.totalorder %s29, %s30
      %p44 = scmp.eq.s32.totalorder %s22, 1
      %p45 = por %p43, %p44
      %p47 = scmp.ne.s32.totalorder %s30, %s46
      %p48 = scmp.eq.s32.totalorder %s22, 0
      %p49 = por %p47, %p48
      %s51 = sadd.s32 %s50, 1
      %p54 = scmp.eq.s32.totalorder %s16, 1
      %p55 = scmp.ne.s32.totalorder %s50, %s52
      %p56 = scmp.eq.s32.totalorder %s16, 0
      %p57 = por %p55, %p56
      %p58 = scmp.ne.s32.totalorder %s50, %s52
      %p59 = scmp.eq.s32.totalorder %s21, 1
      %p60 = por %p58, %p59
      %p61 = scmp.ne.s32.totalorder %s52, %s53
      %p62 = scmp.eq.s32.totalorder %s21, 0
      %p63 = por %p61, %p62
      %p64 = scmp.ne.s32.totalorder %s52, %s53
      %p65 = scmp.eq.s32.totalorder %s22, 1
      %p66 = por %p64, %p65
      %p68 = scmp.ne.s32.totalorder %s53, %s67
      %p69 = scmp.eq.s32.totalorder %s22, 0
      %p70 = por %p68, %p69
      %s71 = ssub.s32 %s16, %s23
      %p72 = scmp.eq.s32.totalorder %s71, 0
      %s74 = sadd.s32 %s73, 1
      %s75 = scalar_select %p72, %s73, %s74
      %p78 = pneg %p72
      %p79 = scmp.eq.s32.totalorder %s16, 1
      %p80 = por %p78, %p79
      %p81 = scmp.ne.s32.totalorder %s73, %s76
      %p82 = scmp.eq.s32.totalorder %s16, 0
      %p83 = por %p81, %p82
      %p84 = scmp.ne.s32.totalorder %s73, %s76
      %p85 = scmp.eq.s32.totalorder %s21, 1
      %p86 = por %p84, %p85
      %p87 = scmp.ne.s32.totalorder %s76, %s77
      %p88 = scmp.eq.s32.totalorder %s21, 0
      %p89 = por %p87, %p88
      %p90 = scmp.ne.s32.totalorder %s76, %s77
      %p91 = scmp.eq.s32.totalorder %s22, 1
      %p92 = por %p90, %p91
      %p94 = scmp.ne.s32.totalorder %s77, %s93
      %p95 = scmp.eq.s32.totalorder %s22, 0
      %p96 = por %p94, %p95
      %s97 = ssub.s32 %s16, %s23
      %p98 = scmp.eq.s32.totalorder %s97, 0
      %s100 = sadd.s32 %s99, 1
      %s101 = scalar_select %p98, %s99, %s100
      %p104 = pneg %p98
      %p105 = scmp.eq.s32.totalorder %s16, 1
      %p106 = por %p104, %p105
      %p107 = scmp.ne.s32.totalorder %s99, %s102
      %p108 = scmp.eq.s32.totalorder %s16, 0
      %p109 = por %p107, %p108
      %p110 = scmp.ne.s32.totalorder %s99, %s102
      %p111 = scmp.eq.s32.totalorder %s21, 1
      %p112 = por %p110, %p111
      %p113 = scmp.ne.s32.totalorder %s102, %s103
      %p114 = scmp.eq.s32.totalorder %s21, 0
      %p115 = por %p113, %p114
      %p116 = scmp.ne.s32.totalorder %s102, %s103
      %p117 = scmp.eq.s32.totalorder %s22, 1
      %p118 = por %p116, %p117
      %p120 = scmp.ne.s32.totalorder %s103, %s119
      %p121 = scmp.eq.s32.totalorder %s22, 0
      %p122 = por %p120, %p121
      %p123 = scmp.le.s32.totalorder 1, %s16
      %p124 = scmp.lt.s32.totalorder %s16, 3
      %p125 = pnand %p123, %p124
      %p126 = pneg %p125
      // Predicated region
      $region9: #{tpu_custom_call.1} parent=5 // pred_check
        _
      $region10: #{tpu_custom_call.1} parent=5 // pred_check_branch
        %128 = sbr.rel (%p125) target = $region12
      $region11: #{tpu_custom_call.1} parent=5 // pred_region
        %s129 = ssub.s32 %s16, 1
        // Predicated region
        $region13: #{tpu_custom_call.1} parent=11 // pred_check
          %p130 = pneg %p63
        $region14: #{tpu_custom_call.1} parent=11 // pred_check_branch
          %132 = sbr.rel (%p130) target = $region16
        $region15: #{tpu_custom_call.1} parent=11 // pred_region
          _
        $region16: #{tpu_custom_call.1} parent=11 // pred_fallthru
          _
      $region12: #{tpu_custom_call.1} parent=5 // pred_fallthru
        _
      %p133 = scmp.lt.s32.totalorder %s16, 2
      // Predicated region
      $region17: #{tpu_custom_call.1} parent=5 // pred_check
        %p134 = pneg %p133
      $region18: #{tpu_custom_call.1} parent=5 // pred_check_branch
        %136 = sbr.rel (%p134) target = $region20
      $region19: #{tpu_custom_call.1} parent=5 // pred_region
        // Predicated region
        $region21: #{tpu_custom_call.1} parent=19 // pred_check
          %p137 = pneg %p36
        $region22: #{tpu_custom_call.1} parent=19 // pred_check_branch
          %139 = sbr.rel (%p137) target = $region24
        $region23: #{tpu_custom_call.1} parent=19 // pred_region
          %s140 = smul.u32 32, %s16
          %p141 = scmp.lt.s32.totalorder %s140, 63
          %s142 = scalar_select %p141, %s140, 63
          %s143 = smul.addr %s142, 8
          %s144 = scalar_lea.vmem %s0, %s143
          %s145 = smul.u32 32, %s16
        $region24: #{tpu_custom_call.1} parent=19 // pred_fallthru
          _
      $region20: #{tpu_custom_call.1} parent=5 // pred_fallthru
        _
      %p146 = scmp.le.s32.totalorder 1, %s16
      %p147 = scmp.lt.s32.totalorder %s16, 3
      %p148 = pnand %p146, %p147
      %p149 = pneg %p148
      // Predicated region
      $region25: #{tpu_custom_call.1} parent=5 // pred_check
        _
      $region26: #{tpu_custom_call.1} parent=5 // pred_check_branch
        %151 = sbr.rel (%p148) target = $region28
      $region27: #{tpu_custom_call.1} parent=5 // pred_region
        %s152 = ssub.s32 %s16, 1
        %s153 = smul.u32 32, %s21
        %p154 = scmp.lt.s32.totalorder %s153, 63
        %s155 = scalar_select %p154, %s153, 63
        %s156 = smul.addr %s155, 8
        %s157 = scalar_lea.vmem %s0, %s156
        %p158 = pneg %p42
        %p159 = pneg %p39
        %p160 = pneg %p63
        %p161 = pneg %p60
        %p162 = pneg %p89
        %p163 = pneg %p86
        %s164 = sand.u32 %s76, 1
        %s165 = scalar_lea.sflag [#allocation3], %s164
        %s166 = sand.u32 %s76, 1
        %s167 = smul.addr %s166, 256
        %s168 = scalar_lea.vmem [#allocation2], %s167
        %p169 = pneg %p115
        %p170 = pneg %p112
        %s171 = sand.u32 %s102, 1
        %s172 = scalar_lea.sflag [#allocation5], %s171
        %s173 = sand.u32 %s102, 1
        %s174 = smul.addr %s173, 512
        %s175 = scalar_lea.vmem [#allocation4], %s174
        %s176 = smul.u32 32, %s21
        %p177 = scmp.lt.s32.totalorder %s176, 63
        %s178 = scalar_select %p177, %s176, 63
        %s179 = smul.addr %s178, 8
        %s180 = scalar_lea.vmem %s0, %s179
        %s181 = smul.u32 32, %s21
        %s182 = smul.u32 32, %s21
        %s183 = smul.u32 32, %s21
        %v184 = vld [vmem:[%s180] sm:$0xff]
        %v185 = vld [vmem:[%s180 + $0x8] sm:$0xff]
        %v186 = vld [vmem:[%s180 + $0x10] sm:$0xff]
        %v187 = vld [vmem:[%s180 + $0x18] sm:$0xff]
        %v188 = vld [vmem:[%s180 + $0x20] sm:$0xff]
        %v189 = vld [vmem:[%s180 + $0x28] sm:$0xff]
        %v190 = vld [vmem:[%s180 + $0x30] sm:$0xff]
        %v191 = vld [vmem:[%s180 + $0x38] sm:$0xff]
        %v192 = vld [vmem:[%s180 + $0x40] sm:$0xff]
        %v193 = vld [vmem:[%s180 + $0x48] sm:$0xff]
        %v194 = vld [vmem:[%s180 + $0x50] sm:$0xff]
        %v195 = vld [vmem:[%s180 + $0x58] sm:$0xff]
        %v196 = vld [vmem:[%s180 + $0x60] sm:$0xff]
        %v197 = vld [vmem:[%s180 + $0x68] sm:$0xff]
        %v198 = vld [vmem:[%s180 + $0x70] sm:$0xff]
        %v199 = vld [vmem:[%s180 + $0x78] sm:$0xff]
        %v200 = vld [vmem:[%s180 + $0x80] sm:$0xff]
        %v201 = vld [vmem:[%s180 + $0x88] sm:$0xff]
        %v202 = vld [vmem:[%s180 + $0x90] sm:$0xff]
        %v203 = vld [vmem:[%s180 + $0x98] sm:$0xff]
        %v204 = vld [vmem:[%s180 + $0xa0] sm:$0xff]
        %v205 = vld [vmem:[%s180 + $0xa8] sm:$0xff]
        %v206 = vld [vmem:[%s180 + $0xb0] sm:$0xff]
        %v207 = vld [vmem:[%s180 + $0xb8] sm:$0xff]
        %v208 = vld [vmem:[%s180 + $0xc0] sm:$0xff]
        %v209 = vld [vmem:[%s180 + $0xc8] sm:$0xff]
        %v210 = vld [vmem:[%s180 + $0xd0] sm:$0xff]
        %v211 = vld [vmem:[%s180 + $0xd8] sm:$0xff]
        %v212 = vld [vmem:[%s180 + $0xe0] sm:$0xff]
        %v213 = vld [vmem:[%s180 + $0xe8] sm:$0xff]
        %v214 = vld [vmem:[%s180 + $0xf0] sm:$0xff]
        %v215 = vld [vmem:[%s180 + $0xf8] sm:$0xff]
        %v216 = vld [vmem:[%s1] sm:$0xff]
        %v217 = vld [vmem:[%s1 + $0x8] sm:$0xff]
        %v218 = vld [vmem:[%s1 + $0x10] sm:$0xff]
        %v219 = vld [vmem:[%s1 + $0x18] sm:$0xff]
        %v220 = vld [vmem:[%s1 + $0x20] sm:$0xff]
        %v221 = vld [vmem:[%s1 + $0x28] sm:$0xff]
        %v222 = vld [vmem:[%s1 + $0x30] sm:$0xff]
        %v223 = vld [vmem:[%s1 + $0x38] sm:$0xff]
        %v224 = vld [vmem:[%s1 + $0x40] sm:$0xff]
        %v225 = vld [vmem:[%s1 + $0x48] sm:$0xff]
        %v226 = vld [vmem:[%s1 + $0x50] sm:$0xff]
        %v227 = vld [vmem:[%s1 + $0x58] sm:$0xff]
        %v228 = vld [vmem:[%s1 + $0x60] sm:$0xff]
        %v229 = vld [vmem:[%s1 + $0x68] sm:$0xff]
        %v230 = vld [vmem:[%s1 + $0x70] sm:$0xff]
        %v231 = vld [vmem:[%s1 + $0x78] sm:$0xff]
        %v232 = vld [vmem:[%s1 + $0x80] sm:$0xff]
        %v233 = vld [vmem:[%s1 + $0x88] sm:$0xff]
        %v234 = vld [vmem:[%s1 + $0x90] sm:$0xff]
        %v235 = vld [vmem:[%s1 + $0x98] sm:$0xff]
        %v236 = vld [vmem:[%s1 + $0xa0] sm:$0xff]
        %v237 = vld [vmem:[%s1 + $0xa8] sm:$0xff]
        %v238 = vld [vmem:[%s1 + $0xb0] sm:$0xff]
        %v239 = vld [vmem:[%s1 + $0xb8] sm:$0xff]
        %vm240 = vcmask 523264
        %v242 = vsel %vm240, %v184, 0
        %v245 = vsel %vm240, %v185, 0
        %v248 = vsel %vm240, %v186, 0
        %v251 = vsel %vm240, %v187, 0
        %v254 = vsel %vm240, %v188, 0
        %v257 = vsel %vm240, %v189, 0
        %v260 = vsel %vm240, %v190, 0
        %v263 = vsel %vm240, %v191, 0
        %v266 = vsel %vm240, %v192, 0
        %v269 = vsel %vm240, %v193, 0
        %v272 = vsel %vm240, %v194, 0
        %v275 = vsel %vm240, %v195, 0
        %v278 = vsel %vm240, %v196, 0
        %v281 = vsel %vm240, %v197, 0
        %v284 = vsel %vm240, %v198, 0
        %v287 = vsel %vm240, %v199, 0
        %v290 = vsel %vm240, %v200, 0
        %v293 = vsel %vm240, %v201, 0
        %v296 = vsel %vm240, %v202, 0
        %v299 = vsel %vm240, %v203, 0
        %v302 = vsel %vm240, %v204, 0
        %v305 = vsel %vm240, %v205, 0
        %v308 = vsel %vm240, %v206, 0
        %v311 = vsel %vm240, %v207, 0
        %v314 = vsel %vm240, %v208, 0
        %v317 = vsel %vm240, %v209, 0
        %v320 = vsel %vm240, %v210, 0
        %v323 = vsel %vm240, %v211, 0
        %v326 = vsel %vm240, %v212, 0
        %v329 = vsel %vm240, %v213, 0
        %v332 = vsel %vm240, %v214, 0
        %v335 = vsel %vm240, %v215, 0
        %337 = vmatprep.subr.mxu0 %v217
        %338 = vmatpush1.msra.mxu0 %v216
        %339 = vmatprep.subr.mxu0 %v220
        %340 = vmatpush1.msra.mxu0 %v219
        %341 = vmatprep.subr.mxu0 %v223
        %342 = vmatpush1.msra.mxu0 %v222
        %343 = vmatprep.subr.mxu0 %v226
        %344 = vmatpush1.msra.mxu0 %v225
        %345 = vmatprep.subr.mxu0 %v229
        %346 = vmatpush1.msra.mxu0 %v228
        %347 = vmatprep.subr.mxu0 %v232
        %348 = vmatpush1.msra.mxu0 %v231
        %349 = vmatprep.subr.mxu0 %v235
        %350 = vmatpush1.msra.mxu0 %v234
        %351 = vmatprep.subr.mxu0 %v238
        %352 = vmatpush1.msra.mxu0 %v237
        %353 = vmatprep.subr.mxu0 0.0
        %354 = vmatpush1.msra.mxu0 0.0
        %355 = vmatprep.subr.mxu0 0.0
        %356 = vmatpush1.msra.mxu0 0.0
        %357 = vmatprep.subr.mxu0 0.0
        %358 = vmatpush1.msra.mxu0 0.0
        %359 = vmatprep.subr.mxu0 0.0
        %360 = vmatpush1.msra.mxu0 0.0
        %361 = vmatprep.subr.mxu0 0.0
        %362 = vmatpush1.msra.mxu0 0.0
        %363 = vmatprep.subr.mxu0 0.0
        %364 = vmatpush1.msra.mxu0 0.0
        %365 = vmatprep.subr.mxu0 0.0
        %366 = vmatpush1.msra.mxu0 0.0
        %367 = vmatprep.subr.mxu0 0.0
        %368 = vmatpush1.msra.mxu0 0.0
        %369 = vmatprep.subr.mxu0 0.0
        %370 = vmatpush1.msra.mxu0 0.0
        %371 = vmatprep.subr.mxu0 0.0
        %372 = vmatpush1.msra.mxu0 0.0
        %373 = vmatprep.subr.mxu0 0.0
        %374 = vmatpush1.msra.mxu0 0.0
        %375 = vmatprep.subr.mxu0 0.0
        %376 = vmatpush1.msra.mxu0 0.0
        %377 = vmatprep.subr.mxu0 0.0
        %378 = vmatpush1.msra.mxu0 0.0
        %379 = vmatprep.subr.mxu0 0.0
        %380 = vmatpush1.msra.mxu0 0.0
        %381 = vmatprep.subr.mxu0 0.0
        %382 = vmatpush1.msra.mxu0 0.0
        %383 = vmatprep.subr.mxu0 0.0
        %384 = vmatpush1.msra.mxu0 0.0
        %385 = vmatprep.subr.mxu0 0.0
        %386 = vmatpush1.msra.mxu0 0.0
        %387 = vmatprep.subr.mxu0 0.0
        %388 = vmatpush1.msra.mxu0 0.0
        %389 = vmatprep.subr.mxu0 0.0
        %390 = vmatpush1.msra.mxu0 0.0
        %391 = vmatprep.subr.mxu0 0.0
        %392 = vmatpush1.msra.mxu0 0.0
        %393 = vmatprep.subr.mxu0 0.0
        %394 = vmatpush1.msra.mxu0 0.0
        %395 = vmatprep.subr.mxu0 0.0
        %396 = vmatpush1.msra.mxu0 0.0
        %397 = vmatprep.subr.mxu0 0.0
        %398 = vmatpush1.msra.mxu0 0.0
        %399 = vmatprep.subr.mxu0 0.0
        %400 = vmatpush1.msra.mxu0 0.0
        %401 = vmatprep.mubr.f32.mxu0 0.0
        %402 = vmatmul.mubr.f32.gmra.mrb[0].mxu0 %v242
        %v403 = vpop.f32.mrb[0].mxu0
        %v404 = vadd.f32 0.0, %v403
        %v405 = vpop.f32.mrb[0].mxu0
        %v406 = vadd.f32 0.0, %v405
        %407 = vmatprep.mubr.f32.mxu0 0.0
        %408 = vmatmul.mubr.f32.gmra.mrb[0].mxu0 %v245
        %v409 = vpop.f32.mrb[0].mxu0
        %v410 = vadd.f32 0.0, %v409
        %v411 = vpop.f32.mrb[0].mxu0
        %v412 = vadd.f32 0.0, %v411
        %413 = vmatprep.mubr.f32.mxu0 0.0
        %414 = vmatmul.mubr.f32.gmra.mrb[0].mxu0 %v248
        %v415 = vpop.f32.mrb[0].mxu0
        %v416 = vadd.f32 0.0, %v415
        %v417 = vpop.f32.mrb[0].mxu0
        %v418 = vadd.f32 0.0, %v417
        %419 = vmatprep.mubr.f32.mxu0 0.0
        %420 = vmatmul.mubr.f32.gmra.mrb[0].mxu0 %v251
        %v421 = vpop.f32.mrb[0].mxu0
        %v422 = vadd.f32 0.0, %v421
        %v423 = vpop.f32.mrb[0].mxu0
        %v424 = vadd.f32 0.0, %v423
        %425 = vmatprep.mubr.f32.mxu0 0.0
        %426 = vmatmul.mubr.f32.gmra.mrb[0].mxu0 %v254
        %v427 = vpop.f32.mrb[0].mxu0
        %v428 = vadd.f32 0.0, %v427
        %v429 = vpop.f32.mrb[0].mxu0
        %v430 = vadd.f32 0.0, %v429
        %431 = vmatprep.mubr.f32.mxu0 0.0
        %432 = vmatmul.mubr.f32.gmra.mrb[0].mxu0 %v257
        %v433 = vpop.f32.mrb[0].mxu0
        %v434 = vadd.f32 0.0, %v433
        %v435 = vpop.f32.mrb[0].mxu0
        %v436 = vadd.f32 0.0, %v435
        %437 = vmatprep.mubr.f32.mxu0 0.0
        %438 = vmatmul.mubr.f32.gmra.mrb[0].mxu0 %v260
        %v439 = vpop.f32.mrb[0].mxu0
        %v440 = vadd.f32 0.0, %v439
        %v441 = vpop.f32.mrb[0].mxu0
        %v442 = vadd.f32 0.0, %v441
        %443 = vmatprep.mubr.f32.mxu0 0.0
        %444 = vmatmul.mubr.f32.gmra.mrb[0].mxu0 %v263
        %v445 = vpop.f32.mrb[0].mxu0
        %v446 = vadd.f32 0.0, %v445
        %v447 = vpop.f32.mrb[0].mxu0
        %v448 = vadd.f32 0.0, %v447
        %449 = vmatprep.mubr.f32.mxu0 0.0
        %450 = vmatmul.mubr.f32.gmra.mrb[0].mxu0 %v266
        %v451 = vpop.f32.mrb[0].mxu0
        %v452 = vadd.f32 0.0, %v451
        %v453 = vpop.f32.mrb[0].mxu0
        %v454 = vadd.f32 0.0, %v453
        %455 = vmatprep.mubr.f32.mxu0 0.0
        %456 = vmatmul.mubr.f32.gmra.mrb[0].mxu0 %v269
        %v457 = vpop.f32.mrb[0].mxu0
        %v458 = vadd.f32 0.0, %v457
        %v459 = vpop.f32.mrb[0].mxu0
        %v460 = vadd.f32 0.0, %v459
        %461 = vmatprep.mubr.f32.mxu0 0.0
        %462 = vmatmul.mubr.f32.gmra.mrb[0].mxu0 %v272
        %v463 = vpop.f32.mrb[0].mxu0
        %v464 = vadd.f32 0.0, %v463
        %v465 = vpop.f32.mrb[0].mxu0
        %v466 = vadd.f32 0.0, %v465
        %467 = vmatprep.mubr.f32.mxu0 0.0
        %468 = vmatmul.mubr.f32.gmra.mrb[0].mxu0 %v275
        %v469 = vpop.f32.mrb[0].mxu0
        %v470 = vadd.f32 0.0, %v469
        %v471 = vpop.f32.mrb[0].mxu0
        %v472 = vadd.f32 0.0, %v471
        %473 = vmatprep.mubr.f32.mxu0 0.0
        %474 = vmatmul.mubr.f32.gmra.mrb[0].mxu0 %v278
        %v475 = vpop.f32.mrb[0].mxu0
        %v476 = vadd.f32 0.0, %v475
        %v477 = vpop.f32.mrb[0].mxu0
        %v478 = vadd.f32 0.0, %v477
        %479 = vmatprep.mubr.f32.mxu0 0.0
        %480 = vmatmul.mubr.f32.gmra.mrb[0].mxu0 %v281
        %v481 = vpop.f32.mrb[0].mxu0
        %v482 = vadd.f32 0.0, %v481
        %v483 = vpop.f32.mrb[0].mxu0
        %v484 = vadd.f32 0.0, %v483
        %485 = vmatprep.mubr.f32.mxu0 0.0
        %486 = vmatmul.mubr.f32.gmra.mrb[0].mxu0 %v284
        %v487 = vpop.f32.mrb[0].mxu0
        %v488 = vadd.f32 0.0, %v487
        %v489 = vpop.f32.mrb[0].mxu0
        %v490 = vadd.f32 0.0, %v489
        %491 = vmatprep.mubr.f32.mxu0 0.0
        %492 = vmatmul.mubr.f32.gmra.mrb[0].mxu0 %v287
        %v493 = vpop.f32.mrb[0].mxu0
        %v494 = vadd.f32 0.0, %v493
        %v495 = vpop.f32.mrb[0].mxu0
        %v496 = vadd.f32 0.0, %v495
        %497 = vmatprep.mubr.f32.mxu0 0.0
        %498 = vmatmul.mubr.f32.gmra.mrb[0].mxu0 %v290
        %v499 = vpop.f32.mrb[0].mxu0
        %v500 = vadd.f32 0.0, %v499
        %v501 = vpop.f32.mrb[0].mxu0
        %v502 = vadd.f32 0.0, %v501
        %503 = vmatprep.mubr.f32.mxu0 0.0
        %504 = vmatmul.mubr.f32.gmra.mrb[0].mxu0 %v293
        %v505 = vpop.f32.mrb[0].mxu0
        %v506 = vadd.f32 0.0, %v505
        %v507 = vpop.f32.mrb[0].mxu0
        %v508 = vadd.f32 0.0, %v507
        %509 = vmatprep.mubr.f32.mxu0 0.0
        %510 = vmatmul.mubr.f32.gmra.mrb[0].mxu0 %v296
        %v511 = vpop.f32.mrb[0].mxu0
        %v512 = vadd.f32 0.0, %v511
        %v513 = vpop.f32.mrb[0].mxu0
        %v514 = vadd.f32 0.0, %v513
        %515 = vmatprep.mubr.f32.mxu0 0.0
        %516 = vmatmul.mubr.f32.gmra.mrb[0].mxu0 %v299
        %v517 = vpop.f32.mrb[0].mxu0
        %v518 = vadd.f32 0.0, %v517
        %v519 = vpop.f32.mrb[0].mxu0
        %v520 = vadd.f32 0.0, %v519
        %521 = vmatprep.mubr.f32.mxu0 0.0
        %522 = vmatmul.mubr.f32.gmra.mrb[0].mxu0 %v302
        %v523 = vpop.f32.mrb[0].mxu0
        %v524 = vadd.f32 0.0, %v523
        %v525 = vpop.f32.mrb[0].mxu0
        %v526 = vadd.f32 0.0, %v525
        %527 = vmatprep.mubr.f32.mxu0 0.0
        %528 = vmatmul.mubr.f32.gmra.mrb[0].mxu0 %v305
        %v529 = vpop.f32.mrb[0].mxu0
        %v530 = vadd.f32 0.0, %v529
        %v531 = vpop.f32.mrb[0].mxu0
        %v532 = vadd.f32 0.0, %v531
        %533 = vmatprep.mubr.f32.mxu0 0.0
        %534 = vmatmul.mubr.f32.gmra.mrb[0].mxu0 %v308
        %v535 = vpop.f32.mrb[0].mxu0
        %v536 = vadd.f32 0.0, %v535
        %v537 = vpop.f32.mrb[0].mxu0
        %v538 = vadd.f32 0.0, %v537
        %539 = vmatprep.mubr.f32.mxu0 0.0
        %540 = vmatmul.mubr.f32.gmra.mrb[0].mxu0 %v311
        %v541 = vpop.f32.mrb[0].mxu0
        %v542 = vadd.f32 0.0, %v541
        %v543 = vpop.f32.mrb[0].mxu0
        %v544 = vadd.f32 0.0, %v543
        %545 = vmatprep.mubr.f32.mxu0 0.0
        %546 = vmatmul.mubr.f32.gmra.mrb[0].mxu0 %v314
        %v547 = vpop.f32.mrb[0].mxu0
        %v548 = vadd.f32 0.0, %v547
        %v549 = vpop.f32.mrb[0].mxu0
        %v550 = vadd.f32 0.0, %v549
        %551 = vmatprep.mubr.f32.mxu0 0.0
        %552 = vmatmul.mubr.f32.gmra.mrb[0].mxu0 %v317
        %v553 = vpop.f32.mrb[0].mxu0
        %v554 = vadd.f32 0.0, %v553
        %v555 = vpop.f32.mrb[0].mxu0
        %v556 = vadd.f32 0.0, %v555
        %557 = vmatprep.mubr.f32.mxu0 0.0
        %558 = vmatmul.mubr.f32.gmra.mrb[0].mxu0 %v320
        %v559 = vpop.f32.mrb[0].mxu0
        %v560 = vadd.f32 0.0, %v559
        %v561 = vpop.f32.mrb[0].mxu0
        %v562 = vadd.f32 0.0, %v561
        %563 = vmatprep.mubr.f32.mxu0 0.0
        %564 = vmatmul.mubr.f32.gmra.mrb[0].mxu0 %v323
        %v565 = vpop.f32.mrb[0].mxu0
        %v566 = vadd.f32 0.0, %v565
        %v567 = vpop.f32.mrb[0].mxu0
        %v568 = vadd.f32 0.0, %v567
        %569 = vmatprep.mubr.f32.mxu0 0.0
        %570 = vmatmul.mubr.f32.gmra.mrb[0].mxu0 %v326
        %v571 = vpop.f32.mrb[0].mxu0
        %v572 = vadd.f32 0.0, %v571
        %v573 = vpop.f32.mrb[0].mxu0
        %v574 = vadd.f32 0.0, %v573
        %575 = vmatprep.mubr.f32.mxu0 0.0
        %576 = vmatmul.mubr.f32.gmra.mrb[0].mxu0 %v329
        %v577 = vpop.f32.mrb[0].mxu0
        %v578 = vadd.f32 0.0, %v577
        %v579 = vpop.f32.mrb[0].mxu0
        %v580 = vadd.f32 0.0, %v579
        %581 = vmatprep.mubr.f32.mxu0 0.0
        %582 = vmatmul.mubr.f32.gmra.mrb[0].mxu0 %v332
        %v583 = vpop.f32.mrb[0].mxu0
        %v584 = vadd.f32 0.0, %v583
        %v585 = vpop.f32.mrb[0].mxu0
        %v586 = vadd.f32 0.0, %v585
        %587 = vmatprep.mubr.f32.mxu0 0.0
        %588 = vmatmul.mubr.f32.gmra.mrb[0].mxu0 %v335
        %v589 = vpop.f32.mrb[0].mxu0
        %v590 = vadd.f32 0.0, %v589
        %v591 = vpop.f32.mrb[0].mxu0
        %v592 = vadd.f32 0.0, %v591
        %593 = vdwg.mxu0
        %594 = vmatprep.subr.mxu0 0.0
        %595 = vmatpush1.msra.mxu0 %v218
        %596 = vmatprep.subr.mxu0 0.0
        %597 = vmatpush1.msra.mxu0 %v221
        %598 = vmatprep.subr.mxu0 0.0
        %599 = vmatpush1.msra.mxu0 %v224
        %600 = vmatprep.subr.mxu0 0.0
        %601 = vmatpush1.msra.mxu0 %v227
        %602 = vmatprep.subr.mxu0 0.0
        %603 = vmatpush1.msra.mxu0 %v230
        %604 = vmatprep.subr.mxu0 0.0
        %605 = vmatpush1.msra.mxu0 %v233
        %606 = vmatprep.subr.mxu0 0.0
        %607 = vmatpush1.msra.mxu0 %v236
        %608 = vmatprep.subr.mxu0 0.0
        %609 = vmatpush1.msra.mxu0 %v239
        %610 = vmatprep.subr.mxu0 0.0
        %611 = vmatpush1.msra.mxu0 0.0
        %612 = vmatprep.subr.mxu0 0.0
        %613 = vmatpush1.msra.mxu0 0.0
        %614 = vmatprep.subr.mxu0 0.0
        %615 = vmatpush1.msra.mxu0 0.0
        %616 = vmatprep.subr.mxu0 0.0
        %617 = vmatpush1.msra.mxu0 0.0
        %618 = vmatprep.subr.mxu0 0.0
        %619 = vmatpush1.msra.mxu0 0.0
        %620 = vmatprep.subr.mxu0 0.0
        %621 = vmatpush1.msra.mxu0 0.0
        %622 = vmatprep.subr.mxu0 0.0
        %623 = vmatpush1.msra.mxu0 0.0
        %624 = vmatprep.subr.mxu0 0.0
        %625 = vmatpush1.msra.mxu0 0.0
        %626 = vmatprep.subr.mxu0 0.0
        %627 = vmatpush1.msra.mxu0 0.0
        %628 = vmatprep.subr.mxu0 0.0
        %629 = vmatpush1.msra.mxu0 0.0
        %630 = vmatprep.subr.mxu0 0.0
        %631 = vmatpush1.msra.mxu0 0.0
        %632 = vmatprep.subr.mxu0 0.0
        %633 = vmatpush1.msra.mxu0 0.0
        %634 = vmatprep.subr.mxu0 0.0
        %635 = vmatpush1.msra.mxu0 0.0
        %636 = vmatprep.subr.mxu0 0.0
        %637 = vmatpush1.msra.mxu0 0.0
        %638 = vmatprep.subr.mxu0 0.0
        %639 = vmatpush1.msra.mxu0 0.0
        %640 = vmatprep.subr.mxu0 0.0
        %641 = vmatpush1.msra.mxu0 0.0
        %642 = vmatprep.subr.mxu0 0.0
        %643 = vmatpush1.msra.mxu0 0.0
        %644 = vmatprep.subr.mxu0 0.0
        %645 = vmatpush1.msra.mxu0 0.0
        %646 = vmatprep.subr.mxu0 0.0
        %647 = vmatpush1.msra.mxu0 0.0
        %648 = vmatprep.subr.mxu0 0.0
        %649 = vmatpush1.msra.mxu0 0.0
        %650 = vmatprep.subr.mxu0 0.0
        %651 = vmatpush1.msra.mxu0 0.0
        %652 = vmatprep.subr.mxu0 0.0
        %653 = vmatpush1.msra.mxu0 0.0
        %654 = vmatprep.subr.mxu0 0.0
        %655 = vmatpush1.msra.mxu0 0.0
        %656 = vmatprep.subr.mxu0 0.0
        %657 = vmatpush1.msra.mxu0 0.0
        %658 = vmatprep.mubr.f32.mxu0 0.0
        %659 = vmatmul.mubr.f32.gmra.mrb[0].mxu0 %v242
        %v660 = vpop.f32.mrb[0].mxu0
        %v661 = vadd.f32 0.0, %v660
        %v662 = vpop.f32.mrb[0].mxu0
        %663 = vmatprep.mubr.f32.mxu0 0.0
        %664 = vmatmul.mubr.f32.gmra.mrb[0].mxu0 %v245
        %v665 = vpop.f32.mrb[0].mxu0
        %v666 = vadd.f32 0.0, %v665
        %v667 = vpop.f32.mrb[0].mxu0
        %668 = vmatprep.mubr.f32.mxu0 0.0
        %669 = vmatmul.mubr.f32.gmra.mrb[0].mxu0 %v248
        %v670 = vpop.f32.mrb[0].mxu0
        %v671 = vadd.f32 0.0, %v670
        %v672 = vpop.f32.mrb[0].mxu0
        %673 = vmatprep.mubr.f32.mxu0 0.0
        %674 = vmatmul.mubr.f32.gmra.mrb[0].mxu0 %v251
        %v675 = vpop.f32.mrb[0].mxu0
        %v676 = vadd.f32 0.0, %v675
        %v677 = vpop.f32.mrb[0].mxu0
        %678 = vmatprep.mubr.f32.mxu0 0.0
        %679 = vmatmul.mubr.f32.gmra.mrb[0].mxu0 %v254
        %v680 = vpop.f32.mrb[0].mxu0
        %v681 = vadd.f32 0.0, %v680
        %v682 = vpop.f32.mrb[0].mxu0
        %683 = vmatprep.mubr.f32.mxu0 0.0
        %684 = vmatmul.mubr.f32.gmra.mrb[0].mxu0 %v257
        %v685 = vpop.f32.mrb[0].mxu0
        %v686 = vadd.f32 0.0, %v685
        %v687 = vpop.f32.mrb[0].mxu0
        %688 = vmatprep.mubr.f32.mxu0 0.0
        %689 = vmatmul.mubr.f32.gmra.mrb[0].mxu0 %v260
        %v690 = vpop.f32.mrb[0].mxu0
        %v691 = vadd.f32 0.0, %v690
        %v692 = vpop.f32.mrb[0].mxu0
        %693 = vmatprep.mubr.f32.mxu0 0.0
        %694 = vmatmul.mubr.f32.gmra.mrb[0].mxu0 %v263
        %v695 = vpop.f32.mrb[0].mxu0
        %v696 = vadd.f32 0.0, %v695
        %v697 = vpop.f32.mrb[0].mxu0
        %698 = vmatprep.mubr.f32.mxu0 0.0
        %699 = vmatmul.mubr.f32.gmra.mrb[0].mxu0 %v266
        %v700 = vpop.f32.mrb[0].mxu0
        %v701 = vadd.f32 0.0, %v700
        %v702 = vpop.f32.mrb[0].mxu0
        %703 = vmatprep.mubr.f32.mxu0 0.0
        %704 = vmatmul.mubr.f32.gmra.mrb[0].mxu0 %v269
        %v705 = vpop.f32.mrb[0].mxu0
        %v706 = vadd.f32 0.0, %v705
        %v707 = vpop.f32.mrb[0].mxu0
        %708 = vmatprep.mubr.f32.mxu0 0.0
        %709 = vmatmul.mubr.f32.gmra.mrb[0].mxu0 %v272
        %v710 = vpop.f32.mrb[0].mxu0
        %v711 = vadd.f32 0.0, %v710
        %v712 = vpop.f32.mrb[0].mxu0
        %713 = vmatprep.mubr.f32.mxu0 0.0
        %714 = vmatmul.mubr.f32.gmra.mrb[0].mxu0 %v275
        %v715 = vpop.f32.mrb[0].mxu0
        %v716 = vadd.f32 0.0, %v715
        %v717 = vpop.f32.mrb[0].mxu0
        %718 = vmatprep.mubr.f32.mxu0 0.0
        %719 = vmatmul.mubr.f32.gmra.mrb[0].mxu0 %v278
        %v720 = vpop.f32.mrb[0].mxu0
        %v721 = vadd.f32 0.0, %v720
        %v722 = vpop.f32.mrb[0].mxu0
        %723 = vmatprep.mubr.f32.mxu0 0.0
        %724 = vmatmul.mubr.f32.gmra.mrb[0].mxu0 %v281
        %v725 = vpop.f32.mrb[0].mxu0
        %v726 = vadd.f32 0.0, %v725
        %v727 = vpop.f32.mrb[0].mxu0
        %728 = vmatprep.mubr.f32.mxu0 0.0
        %729 = vmatmul.mubr.f32.gmra.mrb[0].mxu0 %v284
        %v730 = vpop.f32.mrb[0].mxu0
        %v731 = vadd.f32 0.0, %v730
        %v732 = vpop.f32.mrb[0].mxu0
        %733 = vmatprep.mubr.f32.mxu0 0.0
        %734 = vmatmul.mubr.f32.gmra.mrb[0].mxu0 %v287
        %v735 = vpop.f32.mrb[0].mxu0
        %v736 = vadd.f32 0.0, %v735
        %v737 = vpop.f32.mrb[0].mxu0
        %738 = vmatprep.mubr.f32.mxu0 0.0
        %739 = vmatmul.mubr.f32.gmra.mrb[0].mxu0 %v290
        %v740 = vpop.f32.mrb[0].mxu0
        %v741 = vadd.f32 0.0, %v740
        %v742 = vpop.f32.mrb[0].mxu0
        %743 = vmatprep.mubr.f32.mxu0 0.0
        %744 = vmatmul.mubr.f32.gmra.mrb[0].mxu0 %v293
        %v745 = vpop.f32.mrb[0].mxu0
        %v746 = vadd.f32 0.0, %v745
        %v747 = vpop.f32.mrb[0].mxu0
        %748 = vmatprep.mubr.f32.mxu0 0.0
        %749 = vmatmul.mubr.f32.gmra.mrb[0].mxu0 %v296
        %v750 = vpop.f32.mrb[0].mxu0
        %v751 = vadd.f32 0.0, %v750
        %v752 = vpop.f32.mrb[0].mxu0
        %753 = vmatprep.mubr.f32.mxu0 0.0
        %754 = vmatmul.mubr.f32.gmra.mrb[0].mxu0 %v299
        %v755 = vpop.f32.mrb[0].mxu0
        %v756 = vadd.f32 0.0, %v755
        %v757 = vpop.f32.mrb[0].mxu0
        %758 = vmatprep.mubr.f32.mxu0 0.0
        %759 = vmatmul.mubr.f32.gmra.mrb[0].mxu0 %v302
        %v760 = vpop.f32.mrb[0].mxu0
        %v761 = vadd.f32 0.0, %v760
        %v762 = vpop.f32.mrb[0].mxu0
        %763 = vmatprep.mubr.f32.mxu0 0.0
        %764 = vmatmul.mubr.f32.gmra.mrb[0].mxu0 %v305
        %v765 = vpop.f32.mrb[0].mxu0
        %v766 = vadd.f32 0.0, %v765
        %v767 = vpop.f32.mrb[0].mxu0
        %768 = vmatprep.mubr.f32.mxu0 0.0
        %769 = vmatmul.mubr.f32.gmra.mrb[0].mxu0 %v308
        %v770 = vpop.f32.mrb[0].mxu0
        %v771 = vadd.f32 0.0, %v770
        %v772 = vpop.f32.mrb[0].mxu0
        %773 = vmatprep.mubr.f32.mxu0 0.0
        %774 = vmatmul.mubr.f32.gmra.mrb[0].mxu0 %v311
        %v775 = vpop.f32.mrb[0].mxu0
        %v776 = vadd.f32 0.0, %v775
        %v777 = vpop.f32.mrb[0].mxu0
        %778 = vmatprep.mubr.f32.mxu0 0.0
        %779 = vmatmul.mubr.f32.gmra.mrb[0].mxu0 %v314
        %v780 = vpop.f32.mrb[0].mxu0
        %v781 = vadd.f32 0.0, %v780
        %v782 = vpop.f32.mrb[0].mxu0
        %783 = vmatprep.mubr.f32.mxu0 0.0
        %784 = vmatmul.mubr.f32.gmra.mrb[0].mxu0 %v317
        %v785 = vpop.f32.mrb[0].mxu0
        %v786 = vadd.f32 0.0, %v785
        %v787 = vpop.f32.mrb[0].mxu0
        %788 = vmatprep.mubr.f32.mxu0 0.0
        %789 = vmatmul.mubr.f32.gmra.mrb[0].mxu0 %v320
        %v790 = vpop.f32.mrb[0].mxu0
        %v791 = vadd.f32 0.0, %v790
        %v792 = vpop.f32.mrb[0].mxu0
        %793 = vmatprep.mubr.f32.mxu0 0.0
        %794 = vmatmul.mubr.f32.gmra.mrb[0].mxu0 %v323
        %v795 = vpop.f32.mrb[0].mxu0
        %v796 = vadd.f32 0.0, %v795
        %v797 = vpop.f32.mrb[0].mxu0
        %798 = vmatprep.mubr.f32.mxu0 0.0
        %799 = vmatmul.mubr.f32.gmra.mrb[0].mxu0 %v326
        %v800 = vpop.f32.mrb[0].mxu0
        %v801 = vadd.f32 0.0, %v800
        %v802 = vpop.f32.mrb[0].mxu0
        %803 = vmatprep.mubr.f32.mxu0 0.0
        %804 = vmatmul.mubr.f32.gmra.mrb[0].mxu0 %v329
        %v805 = vpop.f32.mrb[0].mxu0
        %v806 = vadd.f32 0.0, %v805
        %v807 = vpop.f32.mrb[0].mxu0
        %808 = vmatprep.mubr.f32.mxu0 0.0
        %809 = vmatmul.mubr.f32.gmra.mrb[0].mxu0 %v332
        %v810 = vpop.f32.mrb[0].mxu0
        %v811 = vadd.f32 0.0, %v810
        %v812 = vpop.f32.mrb[0].mxu0
        %813 = vmatprep.mubr.f32.mxu0 0.0
        %814 = vmatmul.mubr.f32.gmra.mrb[0].mxu0 %v335
        %v815 = vpop.f32.mrb[0].mxu0
        %v816 = vadd.f32 0.0, %v815
        %v817 = vpop.f32.mrb[0].mxu0
        %818 = vdwg.mxu0
        %v819 = vpack.c.bf16 %v410, %v404
        %v820 = vpack.c.bf16 %v412, %v406
        %v821 = vpack.c.bf16 %v422, %v416
        %v822 = vpack.c.bf16 %v424, %v418
        %v823 = vpack.c.bf16 %v434, %v428
        %v824 = vpack.c.bf16 %v436, %v430
        %v825 = vpack.c.bf16 %v446, %v440
        %v826 = vpack.c.bf16 %v448, %v442
        %v827 = vpack.c.bf16 %v458, %v452
        %v828 = vpack.c.bf16 %v460, %v454
        %v829 = vpack.c.bf16 %v470, %v464
        %v830 = vpack.c.bf16 %v472, %v466
        %v831 = vpack.c.bf16 %v482, %v476
        %v832 = vpack.c.bf16 %v484, %v478
        %v833 = vpack.c.bf16 %v494, %v488
        %v834 = vpack.c.bf16 %v496, %v490
        %v835 = vpack.c.bf16 %v506, %v500
        %v836 = vpack.c.bf16 %v508, %v502
        %v837 = vpack.c.bf16 %v518, %v512
        %v838 = vpack.c.bf16 %v520, %v514
        %v839 = vpack.c.bf16 %v530, %v524
        %v840 = vpack.c.bf16 %v532, %v526
        %v841 = vpack.c.bf16 %v542, %v536
        %v842 = vpack.c.bf16 %v544, %v538
        %v843 = vpack.c.bf16 %v554, %v548
        %v844 = vpack.c.bf16 %v556, %v550
        %v845 = vpack.c.bf16 %v566, %v560
        %v846 = vpack.c.bf16 %v568, %v562
        %v847 = vpack.c.bf16 %v578, %v572
        %v848 = vpack.c.bf16 %v580, %v574
        %v849 = vpack.c.bf16 %v590, %v584
        %v850 = vpack.c.bf16 %v592, %v586
        %v883 = vunpack.c.l.b16 %v819
        %v884 = vunpack.c.l.b16 %v820
        %v885 = vunpack.c.h.b16 %v819
        %v886 = vunpack.c.h.b16 %v820
        %v887 = vunpack.c.l.b16 %v821
        %v888 = vunpack.c.l.b16 %v822
        %v889 = vunpack.c.h.b16 %v821
        %v890 = vunpack.c.h.b16 %v822
        %v891 = vunpack.c.l.b16 %v823
        %v892 = vunpack.c.l.b16 %v824
        %v893 = vunpack.c.h.b16 %v823
        %v894 = vunpack.c.h.b16 %v824
        %v895 = vunpack.c.l.b16 %v825
        %v896 = vunpack.c.l.b16 %v826
        %v897 = vunpack.c.h.b16 %v825
        %v898 = vunpack.c.h.b16 %v826
        %v899 = vunpack.c.l.b16 %v827
        %v900 = vunpack.c.l.b16 %v828
        %v901 = vunpack.c.h.b16 %v827
        %v902 = vunpack.c.h.b16 %v828
        %v903 = vunpack.c.l.b16 %v829
        %v904 = vunpack.c.l.b16 %v830
        %v905 = vunpack.c.h.b16 %v829
        %v906 = vunpack.c.h.b16 %v830
        %v907 = vunpack.c.l.b16 %v831
        %v908 = vunpack.c.l.b16 %v832
        %v909 = vunpack.c.h.b16 %v831
        %v910 = vunpack.c.h.b16 %v832
        %v911 = vunpack.c.l.b16 %v833
        %v912 = vunpack.c.l.b16 %v834
        %v913 = vunpack.c.h.b16 %v833
        %v914 = vunpack.c.h.b16 %v834
        %v915 = vunpack.c.l.b16 %v835
        %v916 = vunpack.c.l.b16 %v836
        %v917 = vunpack.c.h.b16 %v835
        %v918 = vunpack.c.h.b16 %v836
        %v919 = vunpack.c.l.b16 %v837
        %v920 = vunpack.c.l.b16 %v838
        %v921 = vunpack.c.h.b16 %v837
        %v922 = vunpack.c.h.b16 %v838
        %v923 = vunpack.c.l.b16 %v839
        %v924 = vunpack.c.l.b16 %v840
        %v925 = vunpack.c.h.b16 %v839
        %v926 = vunpack.c.h.b16 %v840
        %v927 = vunpack.c.l.b16 %v841
        %v928 = vunpack.c.l.b16 %v842
        %v929 = vunpack.c.h.b16 %v841
        %v930 = vunpack.c.h.b16 %v842
        %v931 = vunpack.c.l.b16 %v843
        %v932 = vunpack.c.l.b16 %v844
        %v933 = vunpack.c.h.b16 %v843
        %v934 = vunpack.c.h.b16 %v844
        %v935 = vunpack.c.l.b16 %v845
        %v936 = vunpack.c.l.b16 %v846
        %v937 = vunpack.c.h.b16 %v845
        %v938 = vunpack.c.h.b16 %v846
        %v939 = vunpack.c.l.b16 %v847
        %v940 = vunpack.c.l.b16 %v848
        %v941 = vunpack.c.h.b16 %v847
        %v942 = vunpack.c.h.b16 %v848
        %v943 = vunpack.c.l.b16 %v849
        %v944 = vunpack.c.l.b16 %v850
        %v945 = vunpack.c.h.b16 %v849
        %v946 = vunpack.c.h.b16 %v850
        %v947 = vpack.c.b16 %v884, %v883
        %v948 = vpack.c.b16 %v886, %v885
        %v949 = vpack.c.b16 %v888, %v887
        %v950 = vpack.c.b16 %v890, %v889
        %v951 = vpack.c.b16 %v892, %v891
        %v952 = vpack.c.b16 %v894, %v893
        %v953 = vpack.c.b16 %v896, %v895
        %v954 = vpack.c.b16 %v898, %v897
        %v955 = vpack.c.b16 %v900, %v899
        %v956 = vpack.c.b16 %v902, %v901
        %v957 = vpack.c.b16 %v904, %v903
        %v958 = vpack.c.b16 %v906, %v905
        %v959 = vpack.c.b16 %v908, %v907
        %v960 = vpack.c.b16 %v910, %v909
        %v961 = vpack.c.b16 %v912, %v911
        %v962 = vpack.c.b16 %v914, %v913
        %v963 = vpack.c.b16 %v916, %v915
        %v964 = vpack.c.b16 %v918, %v917
        %v965 = vpack.c.b16 %v920, %v919
        %v966 = vpack.c.b16 %v922, %v921
        %v967 = vpack.c.b16 %v924, %v923
        %v968 = vpack.c.b16 %v926, %v925
        %v969 = vpack.c.b16 %v928, %v927
        %v970 = vpack.c.b16 %v930, %v929
        %v971 = vpack.c.b16 %v932, %v931
        %v972 = vpack.c.b16 %v934, %v933
        %v973 = vpack.c.b16 %v936, %v935
        %v974 = vpack.c.b16 %v938, %v937
        %v975 = vpack.c.b16 %v940, %v939
        %v976 = vpack.c.b16 %v942, %v941
        %v977 = vpack.c.b16 %v944, %v943
        %v978 = vpack.c.b16 %v946, %v945
        %1011 = vst [vmem:[%s168] sm:$0xff] %v947
        %1012 = vst [vmem:[%s168 + $0x8] sm:$0xff] %v948
        %1013 = vst [vmem:[%s168 + $0x10] sm:$0xff] %v949
        %1014 = vst [vmem:[%s168 + $0x18] sm:$0xff] %v950
        %1015 = vst [vmem:[%s168 + $0x20] sm:$0xff] %v951
        %1016 = vst [vmem:[%s168 + $0x28] sm:$0xff] %v952
        %1017 = vst [vmem:[%s168 + $0x30] sm:$0xff] %v953
        %1018 = vst [vmem:[%s168 + $0x38] sm:$0xff] %v954
        %1019 = vst [vmem:[%s168 + $0x40] sm:$0xff] %v955
        %1020 = vst [vmem:[%s168 + $0x48] sm:$0xff] %v956
        %1021 = vst [vmem:[%s168 + $0x50] sm:$0xff] %v957
        %1022 = vst [vmem:[%s168 + $0x58] sm:$0xff] %v958
        %1023 = vst [vmem:[%s168 + $0x60] sm:$0xff] %v959
        %1024 = vst [vmem:[%s168 + $0x68] sm:$0xff] %v960
        %1025 = vst [vmem:[%s168 + $0x70] sm:$0xff] %v961
        %1026 = vst [vmem:[%s168 + $0x78] sm:$0xff] %v962
        %1027 = vst [vmem:[%s168 + $0x80] sm:$0xff] %v963
        %1028 = vst [vmem:[%s168 + $0x88] sm:$0xff] %v964
        %1029 = vst [vmem:[%s168 + $0x90] sm:$0xff] %v965
        %1030 = vst [vmem:[%s168 + $0x98] sm:$0xff] %v966
        %1031 = vst [vmem:[%s168 + $0xa0] sm:$0xff] %v967
        %1032 = vst [vmem:[%s168 + $0xa8] sm:$0xff] %v968
        %1033 = vst [vmem:[%s168 + $0xb0] sm:$0xff] %v969
        %1034 = vst [vmem:[%s168 + $0xb8] sm:$0xff] %v970
        %1035 = vst [vmem:[%s168 + $0xc0] sm:$0xff] %v971
        %1036 = vst [vmem:[%s168 + $0xc8] sm:$0xff] %v972
        %1037 = vst [vmem:[%s168 + $0xd0] sm:$0xff] %v973
        %1038 = vst [vmem:[%s168 + $0xd8] sm:$0xff] %v974
        %1039 = vst [vmem:[%s168 + $0xe0] sm:$0xff] %v975
        %1040 = vst [vmem:[%s168 + $0xe8] sm:$0xff] %v976
        %1041 = vst [vmem:[%s168 + $0xf0] sm:$0xff] %v977
        %1042 = vst [vmem:[%s168 + $0xf8] sm:$0xff] %v978
        %1043 = vst [vmem:[%s175] sm:$0xff] %v406
        %1044 = vst [vmem:[%s175 + $0x8] sm:$0xff] %v661
        %1045 = vst [vmem:[%s175 + $0x10] sm:$0xff] %v412
        %1046 = vst [vmem:[%s175 + $0x18] sm:$0xff] %v666
        %1047 = vst [vmem:[%s175 + $0x20] sm:$0xff] %v418
        %1048 = vst [vmem:[%s175 + $0x28] sm:$0xff] %v671
        %1049 = vst [vmem:[%s175 + $0x30] sm:$0xff] %v424
        %1050 = vst [vmem:[%s175 + $0x38] sm:$0xff] %v676
        %1051 = vst [vmem:[%s175 + $0x40] sm:$0xff] %v430
        %1052 = vst [vmem:[%s175 + $0x48] sm:$0xff] %v681
        %1053 = vst [vmem:[%s175 + $0x50] sm:$0xff] %v436
        %1054 = vst [vmem:[%s175 + $0x58] sm:$0xff] %v686
        %1055 = vst [vmem:[%s175 + $0x60] sm:$0xff] %v442
        %1056 = vst [vmem:[%s175 + $0x68] sm:$0xff] %v691
        %1057 = vst [vmem:[%s175 + $0x70] sm:$0xff] %v448
        %1058 = vst [vmem:[%s175 + $0x78] sm:$0xff] %v696
        %1059 = vst [vmem:[%s175 + $0x80] sm:$0xff] %v454
        %1060 = vst [vmem:[%s175 + $0x88] sm:$0xff] %v701
        %1061 = vst [vmem:[%s175 + $0x90] sm:$0xff] %v460
        %1062 = vst [vmem:[%s175 + $0x98] sm:$0xff] %v706
        %1063 = vst [vmem:[%s175 + $0xa0] sm:$0xff] %v466
        %1064 = vst [vmem:[%s175 + $0xa8] sm:$0xff] %v711
        %1065 = vst [vmem:[%s175 + $0xb0] sm:$0xff] %v472
        %1066 = vst [vmem:[%s175 + $0xb8] sm:$0xff] %v716
        %1067 = vst [vmem:[%s175 + $0xc0] sm:$0xff] %v478
        %1068 = vst [vmem:[%s175 + $0xc8] sm:$0xff] %v721
        %1069 = vst [vmem:[%s175 + $0xd0] sm:$0xff] %v484
        %1070 = vst [vmem:[%s175 + $0xd8] sm:$0xff] %v726
        %1071 = vst [vmem:[%s175 + $0xe0] sm:$0xff] %v490
        %1072 = vst [vmem:[%s175 + $0xe8] sm:$0xff] %v731
        %1073 = vst [vmem:[%s175 + $0xf0] sm:$0xff] %v496
        %1074 = vst [vmem:[%s175 + $0xf8] sm:$0xff] %v736
        %1075 = vst [vmem:[%s175 + $0x100] sm:$0xff] %v502
        %1076 = vst [vmem:[%s175 + $0x108] sm:$0xff] %v741
        %1077 = vst [vmem:[%s175 + $0x110] sm:$0xff] %v508
        %1078 = vst [vmem:[%s175 + $0x118] sm:$0xff] %v746
        %1079 = vst [vmem:[%s175 + $0x120] sm:$0xff] %v514
        %1080 = vst [vmem:[%s175 + $0x128] sm:$0xff] %v751
        %1081 = vst [vmem:[%s175 + $0x130] sm:$0xff] %v520
        %1082 = vst [vmem:[%s175 + $0x138] sm:$0xff] %v756
        %1083 = vst [vmem:[%s175 + $0x140] sm:$0xff] %v526
        %1084 = vst [vmem:[%s175 + $0x148] sm:$0xff] %v761
        %1085 = vst [vmem:[%s175 + $0x150] sm:$0xff] %v532
        %1086 = vst [vmem:[%s175 + $0x158] sm:$0xff] %v766
        %1087 = vst [vmem:[%s175 + $0x160] sm:$0xff] %v538
        %1088 = vst [vmem:[%s175 + $0x168] sm:$0xff] %v771
        %1089 = vst [vmem:[%s175 + $0x170] sm:$0xff] %v544
        %1090 = vst [vmem:[%s175 + $0x178] sm:$0xff] %v776
        %1091 = vst [vmem:[%s175 + $0x180] sm:$0xff] %v550
        %1092 = vst [vmem:[%s175 + $0x188] sm:$0xff] %v781
        %1093 = vst [vmem:[%s175 + $0x190] sm:$0xff] %v556
        %1094 = vst [vmem:[%s175 + $0x198] sm:$0xff] %v786
        %1095 = vst [vmem:[%s175 + $0x1a0] sm:$0xff] %v562
        %1096 = vst [vmem:[%s175 + $0x1a8] sm:$0xff] %v791
        %1097 = vst [vmem:[%s175 + $0x1b0] sm:$0xff] %v568
        %1098 = vst [vmem:[%s175 + $0x1b8] sm:$0xff] %v796
        %1099 = vst [vmem:[%s175 + $0x1c0] sm:$0xff] %v574
        %1100 = vst [vmem:[%s175 + $0x1c8] sm:$0xff] %v801
        %1101 = vst [vmem:[%s175 + $0x1d0] sm:$0xff] %v580
        %1102 = vst [vmem:[%s175 + $0x1d8] sm:$0xff] %v806
        %1103 = vst [vmem:[%s175 + $0x1e0] sm:$0xff] %v586
        %1104 = vst [vmem:[%s175 + $0x1e8] sm:$0xff] %v811
        %1105 = vst [vmem:[%s175 + $0x1f0] sm:$0xff] %v592
        %1106 = vst [vmem:[%s175 + $0x1f8] sm:$0xff] %v816
        %s1107 = sand.u32 %s76, 1
        %s1108 = scalar_lea.sflag [#allocation3], %s1107
        %s1109 = sand.u32 %s76, 1
        %s1110 = smul.addr %s1109, 256
        %s1111 = scalar_lea.vmem [#allocation2], %s1110
        %s1112 = sand.u32 %s102, 1
        %s1113 = scalar_lea.sflag [#allocation5], %s1112
        %s1114 = sand.u32 %s102, 1
        %s1115 = smul.addr %s1114, 512
        %s1116 = scalar_lea.vmem [#allocation4], %s1115
        // Predicated region
        $region29: #{tpu_custom_call.1} parent=27 // pred_check
          %p1117 = pneg %p86
        $region30: #{tpu_custom_call.1} parent=27 // pred_check_branch
          %1119 = sbr.rel (%p1117) target = $region32
        $region31: #{tpu_custom_call.1} parent=27 // pred_region
          %s1120 = smul.u32 32, %s21
          %s1122 = ssub.s32 4096, 4096
          %1123 = vsyncadd %s1108, %s1122
          %s1124 = smul.addr %s1120, 2
          %s1125 = smul.addr %s1124, 64
          %s1126 = scalar_lea.hbm %s2, %s1125
          %s1127 = sshll.u32 %s1111, 4
          %s1128 = int_to_ptr.vmem [resolvable:$true] %s1127
          %1133 = dma.vmem_to_hbm [thread:$0]  %s1128, 4096, %s1126, %s1108, 128, 128, 8
        $region32: #{tpu_custom_call.1} parent=27 // pred_fallthru
          _
        // Predicated region
        $region33: #{tpu_custom_call.1} parent=27 // pred_check
          %p1134 = pneg %p112
        $region34: #{tpu_custom_call.1} parent=27 // pred_check_branch
          %1136 = sbr.rel (%p1134) target = $region36
        $region35: #{tpu_custom_call.1} parent=27 // pred_region
          %s1137 = smul.u32 32, %s21
          %s1139 = ssub.s32 8192, 8192
          %1140 = vsyncadd %s1113, %s1139
          %s1141 = smul.addr %s1137, 2
          %s1142 = smul.addr %s1141, 128
          %s1143 = scalar_lea.hbm %s3, %s1142
          %s1144 = sshll.u32 %s1116, 4
          %s1145 = int_to_ptr.vmem [resolvable:$true] %s1144
          %1150 = dma.vmem_to_hbm [thread:$0]  %s1145, 8192, %s1143, %s1113, 256, 256, 16
        $region36: #{tpu_custom_call.1} parent=27 // pred_fallthru
          _
      $region28: #{tpu_custom_call.1} parent=5 // pred_fallthru
        _
      %p1151 = scmp.le.s32.totalorder 2, %s16
      // Predicated region
      $region37: #{tpu_custom_call.1} parent=5 // pred_check
        %p1152 = pneg %p1151
      $region38: #{tpu_custom_call.1} parent=5 // pred_check_branch
        %1154 = sbr.rel (%p1152) target = $region40
      $region39: #{tpu_custom_call.1} parent=5 // pred_region
        %s1155 = ssub.s32 %s16, 2
        // Predicated region
        $region41: #{tpu_custom_call.1} parent=39 // pred_check
          %p1156 = pneg %p92
        $region42: #{tpu_custom_call.1} parent=39 // pred_check_branch
          %1158 = sbr.rel (%p1156) target = $region44
        $region43: #{tpu_custom_call.1} parent=39 // pred_region
          %s1159 = sand.u32 %s77, 1
          %s1160 = scalar_lea.sflag [#allocation3], %s1159
          %s1161 = sand.u32 %s77, 1
          %s1162 = smul.addr %s1161, 256
          %s1163 = scalar_lea.vmem [#allocation2], %s1162
          %1164 = dma.done %s1160, 4096
        $region44: #{tpu_custom_call.1} parent=39 // pred_fallthru
          _
        // Predicated region
        $region45: #{tpu_custom_call.1} parent=39 // pred_check
          %p1165 = pneg %p118
        $region46: #{tpu_custom_call.1} parent=39 // pred_check_branch
          %1167 = sbr.rel (%p1165) target = $region48
        $region47: #{tpu_custom_call.1} parent=39 // pred_region
          %s1168 = sand.u32 %s103, 1
          %s1169 = scalar_lea.sflag [#allocation5], %s1168
          %s1170 = sand.u32 %s103, 1
          %s1171 = smul.addr %s1170, 512
          %s1172 = scalar_lea.vmem [#allocation4], %s1171
          %1173 = dma.done %s1169, 8192
        $region48: #{tpu_custom_call.1} parent=39 // pred_fallthru
          _
      $region40: #{tpu_custom_call.1} parent=5 // pred_fallthru
        _
    $region6: #{tpu_custom_call.1} parent=1 // loop_footer
      %s20 = sadd.s32 1, %s16
    $region7: #{tpu_custom_call.1} parent=1 // loop_footer_branch
      %15 = sbr.rel target = $region3
    $region8: #{tpu_custom_call.1} parent=1 // loop_exit
      _
    %1174 = vsyncpa [#allocation3], 1
    %s1175 = scalar_lea.sflag [#allocation3], 1
    %1176 = vsyncpa %s1175, 1
    %1177 = vsyncpa [#allocation5], 1
    %s1178 = scalar_lea.sflag [#allocation5], 1
    %1179 = vsyncpa %s1178, 1

</llo_original>
